<compile_context>
chip_gen: v7x
topology: tpu7x:2x2x1
jax: 0.10.0
libtpu: 0.0.40
codegen_flags: <defaults>
</compile_context>

<pallas_src>
import functools
import math

import jax
import jax.numpy as jnp
from jax import lax
from jax.experimental import pallas as pl
from jax.experimental.pallas import tpu as pltpu


def _round_up(x, m):
    return ((x + m - 1) // m) * m


def _platt_kernel(x_ref, w_ref, b_ref, o_ref):
    # x_ref : (TM, C)  VMEM row tile of logits (lane-padded to 128 inside VMEM)
    # w_ref : (C, C)   VMEM, PyTorch (out, in) layout, pinned across the grid
    # b_ref : (1, C)   VMEM, pinned
    # o_ref : (TM, C)  VMEM
    # y = x @ W^T + b, expressed as a trans-B contraction on the MXU.
    acc = lax.dot_general(
        x_ref[...],
        w_ref[...],
        dimension_numbers=(((1,), (1,)), ((), ())),  # contract x's C with W's in-dim
        preferred_element_type=jnp.float32,
    )
    o_ref[...] = (acc + b_ref[...].astype(jnp.float32)).astype(o_ref.dtype)


@functools.partial(jax.jit, static_argnames=("tm", "force_pallas"))
def platt_forward(logits, weight, bias, *, tm=2048, force_pallas=False):
    """Matrix-scaling forward: logits @ weight.T + bias.

    logits: (N, C); weight: (C, C) PyTorch-style (out, in); bias: (C,).
    """
    n, c = logits.shape
    assert weight.shape == (c, c), "Platt weight must be (out_size, out_size)"
    assert bias.shape == (c,), "Platt bias must be (out_size,)"

    # Small-batch dispatch: for tiny N a fused XLA GEMM beats any custom kernel
    # (launch + per-step overhead dominate). Pallas pays off for large N.
    if not force_pallas and n < 4096:
        y = jnp.dot(logits, weight.T, preferred_element_type=jnp.float32) + bias
        return y.astype(logits.dtype)

    # Row tile: big enough to amortize per-step overhead, a multiple of 8,
    # never larger than the batch, and capped so the grid has >=2 iterations
    # (v7x megacore: both TensorCores get work).
    tm = min(tm, _round_up(n, 8))
    tm = min(tm, max(8, _round_up(pl.cdiv(n, 2), 8)))
    grid = (pl.cdiv(n, tm),)

    # Advisory cost with true (unpadded) sizes.
    act_bytes = logits.dtype.itemsize
    cost = pl.CostEstimate(
        flops=2 * n * c * c,
        transcendentals=0,
        bytes_accessed=act_bytes * 2 * n * c
        + weight.dtype.itemsize * c * c
        + bias.dtype.itemsize * c,
    )

    return pl.pallas_call(
        _platt_kernel,
        out_shape=jax.ShapeDtypeStruct((n, c), logits.dtype),
        grid_spec=pltpu.PrefetchScalarGridSpec(
            num_scalar_prefetch=0,
            grid=grid,
            in_specs=[
                pl.BlockSpec((tm, c), lambda i: (i, 0)),   # row tile of x (full C width)
                pl.BlockSpec((c, c), lambda i: (0, 0)),    # weight, pinned (full array)
                pl.BlockSpec((1, c), lambda i: (0, 0)),    # bias, pinned (full array)
            ],
            out_specs=pl.BlockSpec((tm, c), lambda i: (i, 0)),
        ),
        compiler_params=pltpu.CompilerParams(
            # Row tiles are independent -> megacore-shardable on v7x.
            dimension_semantics=("parallel",),
        ),
        cost_estimate=cost,
    )(logits, weight, bias.reshape(1, c))


def make_platt_params(key, out_size=10, dtype=jnp.float32):
    """Deterministic init mirroring nn.Linear defaults:
    weight, bias ~ U(-1/sqrt(in_features), 1/sqrt(in_features)).
    (Platt's __init__ special-cases never match 'fc', so default init applies.)"""
    kw, kb = jax.random.split(key)
    bound = 1.0 / math.sqrt(out_size)
    weight = jax.random.uniform(kw, (out_size, out_size), dtype,
                                minval=-bound, maxval=bound)
    bias = jax.random.uniform(kb, (out_size,), dtype,
                              minval=-bound, maxval=bound)
    return weight, bias


if __name__ == "__main__":
    out_size = 10

    key = jax.random.PRNGKey(0)
    k_param, k_x1, k_x2 = jax.random.split(key, 3)
    weight, bias = make_platt_params(k_param, out_size=out_size)

    # 1) Tiny batch, Pallas path forced — exercises the kernel end-to-end.
    x_small = jax.random.normal(k_x1, (8, out_size), jnp.float32)
    y_small = jax.block_until_ready(
        platt_forward(x_small, weight, bias, force_pallas=True))
    ref_small = x_small @ weight.T + bias
    assert y_small.shape == (8, out_size)
    assert jnp.allclose(y_small, ref_small, atol=1e-5, rtol=1e-5), "mismatch (small)"

    # 2) Batch not divisible by the row tile -> exercises the masked partial
    #    last block of the cdiv grid (N=300, TM=152 -> grid=2, last tile 148 rows).
    x_mid = jax.random.normal(k_x2, (300, out_size), jnp.float32)
    y_mid = jax.block_until_ready(
        platt_forward(x_mid, weight, bias, force_pallas=True))
    ref_mid = x_mid @ weight.T + bias
    assert y_mid.shape == (300, out_size)
    assert jnp.allclose(y_mid, ref_mid, atol=1e-5, rtol=1e-5), "mismatch (partial tile)"

    # 3) Default dispatch for small N uses the fused XLA GEMM path.
    y_xla = jax.block_until_ready(platt_forward(x_small, weight, bias))
    assert jnp.allclose(y_xla, ref_small, atol=1e-5, rtol=1e-5), "mismatch (xla path)"

    print("KERNEL_OK")
</pallas_src>

<mosaic_0001>
module attributes {stable_mosaic.version = 11 : i64} {
  func.func @_platt_kernel(%arg0: i32, %arg1: memref<8x10xf32, #tpu.memory_space<vmem>>, %arg2: memref<10x10xf32, #tpu.memory_space<vmem>>, %arg3: memref<1x10xf32, #tpu.memory_space<vmem>>, %arg4: memref<8x10xf32, #tpu.memory_space<vmem>>) attributes {dimension_semantics = [#tpu.dimension_semantics<parallel>], iteration_bounds = array<i64: 1>, scalar_prefetch = 0 : i64, scratch_operands = 0 : i64, tpu.core_type = #tpu.core_type<tc>, window_params = [{transform_indices = @transform_0, window_bounds = array<i64: 8, 10>}, {pipeline_mode = #tpu.pipeline_mode<synchronous>, transform_indices = @transform_1, window_bounds = array<i64: 10, 10>}, {pipeline_mode = #tpu.pipeline_mode<synchronous>, transform_indices = @transform_2, window_bounds = array<i64: 1, 10>}, {transform_indices = @transform_3, window_bounds = array<i64: 8, 10>}]} {
    %c0 = arith.constant 0 : index
    %c0_0 = arith.constant 0 : index
    %0 = vector.load %arg1[%c0, %c0_0] : memref<8x10xf32, #tpu.memory_space<vmem>>, vector<8x10xf32>
    %c0_1 = arith.constant 0 : index
    %c0_2 = arith.constant 0 : index
    %1 = vector.load %arg2[%c0_1, %c0_2] : memref<10x10xf32, #tpu.memory_space<vmem>>, vector<10x10xf32>
    %cst = arith.constant dense<0.000000e+00> : vector<8x10xf32>
    %2 = tpu.matmul %0, %1, %cst {dimension_numbers = #tpu.dot_dimension_numbers<[1], [1], [0], [0], [0, 0, 1, 0], [], []>} : vector<8x10xf32>, vector<10x10xf32>, vector<8x10xf32> -> vector<8x10xf32>
    %c0_3 = arith.constant 0 : index
    %c0_4 = arith.constant 0 : index
    %3 = vector.load %arg3[%c0_3, %c0_4] : memref<1x10xf32, #tpu.memory_space<vmem>>, vector<1x10xf32>
    %4 = vector.broadcast %3 : vector<1x10xf32> to vector<8x10xf32>
    %5 = arith.addf %2, %4 : vector<8x10xf32>
    %c0_5 = arith.constant 0 : index
    %c0_6 = arith.constant 0 : index
    %6 = vector.load %arg4[%c0_5, %c0_6] : memref<8x10xf32, #tpu.memory_space<vmem>>, vector<8x10xf32>
    tpu.vector_store %arg4[%c0_5, %c0_6], %5 {strides = array<i32>} : memref<8x10xf32, #tpu.memory_space<vmem>>, vector<8x10xf32>,
    return
  }
  func.func @transform_0(%arg0: i32) -> (i32, i32) {
    %c0_i32 = arith.constant 0 : i32
    %c0_i32_0 = arith.constant 0 : i32
    return %arg0, %c0_i32 : i32, i32
  }
  func.func @transform_1(%arg0: i32) -> (i32, i32) {
    %c0_i32 = arith.constant 0 : i32
    %c0_i32_0 = arith.constant 0 : i32
    %c0_i32_1 = arith.constant 0 : i32
    return %c0_i32, %c0_i32_0 : i32, i32
  }
  func.func @transform_2(%arg0: i32) -> (i32, i32) {
    %c0_i32 = arith.constant 0 : i32
    %c0_i32_0 = arith.constant 0 : i32
    %c0_i32_1 = arith.constant 0 : i32
    return %c0_i32, %c0_i32_0 : i32, i32
  }
  func.func @transform_3(%arg0: i32) -> (i32, i32) {
    %c0_i32 = arith.constant 0 : i32
    %c0_i32_0 = arith.constant 0 : i32
    return %arg0, %c0_i32 : i32, i32
  }
}

</mosaic_0001>

<llo_original>
// kernel: platt_forward.1
$region0: #{platt_forward.1}
  #allocation0 [shape = 'u32[]', space=smem, size = 0x4, offset = 0x4, fixed_abs, tag = 'smem constant byte address 0x4 - core index']
  #allocation1 [shape = 'u32[144,128]{1,0:T(1,128)}', space=vmem, size = 0x12000, scoped, tag = 'internal scratch']
  %s0 = inlined_call_operand.hbm [shape: f32[8,10], index: 0, kind: input, shape index: {}]
  %s1 = inlined_call_operand.hbm [shape: f32[10,10], index: 1, kind: input, shape index: {}]
  %s2 = inlined_call_operand.vmem [shape: f32[1,10], index: 2, kind: input, shape index: {}]
  %s3 = inlined_call_operand.hbm [shape: f32[8,10], index: 3, kind: output, shape index: {}]
  %s4 = sld [smem:[#allocation0]]
  $region30: #{platt_forward.1} parent=0
    _
  %s6 = ssub.s32 1, %s4
  %s7 = scalar_select 0, %s6, %s4
  $region1: #{platt_forward.1} parent=0
    #allocation2 [shape = 'u8[4096]{0}', space=vmem, size = 0x1000, scoped, tag = 'input window, operand 0, single buffered']
    #allocation3 [shape = 's32[1]{0}', space=sflag, size = 0x4, scoped, tag = 'scoped memory for platt_forward.1']
    #allocation4 [shape = 's32[1]{0}', space=sflag, size = 0x4, scoped, tag = 'scoped memory for platt_forward.1']
    #allocation5 [shape = 'u8[8192]{0}', space=vmem, size = 0x2000, scoped, tag = 'input window, operand 1, single buffered']
    #allocation6 [shape = 's32[1]{0}', space=sflag, size = 0x4, scoped, tag = 'scoped memory for platt_forward.1']
    #allocation7 [shape = 'u8[4096]{0}', space=vmem, size = 0x1000, scoped, tag = 'output window, operand 0, single buffered']
    %8 = vsyncpa [#allocation3], 0
    %9 = vsyncpa [#allocation6], 0
    %10 = vsyncpa [#allocation4], 0
    // Predicated region
    $region2: #{platt_forward.1} parent=1 // pred_check
      _
    $region3: #{platt_forward.1} parent=1 // pred_check_branch
      %12 = sbr.rel (0) target = $region5
    $region4: #{platt_forward.1} parent=1 // pred_region
      %s14 = ssub.s32 128, 128
      %15 = vsyncadd [#allocation3], %s14
      %s17 = sshll.u32 [#allocation2], 4
      %s18 = int_to_ptr.vmem [resolvable:$true] %s17
      %20 = dma.hbm_to_vmem [thread:$0]  %s0, 128, %s18, [#allocation3]
    $region5: #{platt_forward.1} parent=1 // pred_fallthru
      _
    // Predicated region
    $region6: #{platt_forward.1} parent=1 // pred_check
      _
    $region7: #{platt_forward.1} parent=1 // pred_check_branch
      %22 = sbr.rel (0) target = $region9
    $region8: #{platt_forward.1} parent=1 // pred_region
      %s24 = ssub.s32 256, 256
      %25 = vsyncadd [#allocation6], %s24
      %s26 = sshll.u32 [#allocation5], 4
      %s27 = int_to_ptr.vmem [resolvable:$true] %s26
      %32 = dma.hbm_to_vmem [thread:$0]  %s1, 256, %s27, [#allocation6], 128, 128, 8
    $region9: #{platt_forward.1} parent=1 // pred_fallthru
      _
    // Predicated region
    $region10: #{platt_forward.1} parent=1 // pred_check
      _
    $region11: #{platt_forward.1} parent=1 // pred_check_branch
      %34 = sbr.rel (0) target = $region13
    $region12: #{platt_forward.1} parent=1 // pred_region
      _
    $region13: #{platt_forward.1} parent=1 // pred_fallthru
      _
    // Predicated region
    $region14: #{platt_forward.1} parent=1 // pred_check
      _
    $region15: #{platt_forward.1} parent=1 // pred_check_branch
      %36 = sbr.rel (0) target = $region17
    $region16: #{platt_forward.1} parent=1 // pred_region
      %37 = dma.done [#allocation3], 128
    $region17: #{platt_forward.1} parent=1 // pred_fallthru
      _
    // Predicated region
    $region18: #{platt_forward.1} parent=1 // pred_check
      _
    $region19: #{platt_forward.1} parent=1 // pred_check_branch
      %39 = sbr.rel (0) target = $region21
    $region20: #{platt_forward.1} parent=1 // pred_region
      %40 = dma.done [#allocation6], 256
    $region21: #{platt_forward.1} parent=1 // pred_fallthru
      _
    %v41 = vld [vmem:[#allocation2] sm:$0xff]
    %v42 = vld [vmem:[#allocation5] sm:$0xff]
    %v43 = vld [vmem:[#allocation5 + $0x8] sm:$0x3]
    %v44 = vld [vmem:[%s2] sm:$0x1]
    %v46 = vlaneseq
    %v47 = vshrl.u32 %v46, 7
    %v48 = vsub.s32 0, %v47
    %v49 = vrot.slane %v44, %v48
    %vm51 = vcmask 80896
    %v53 = vsel %vm51, %v41, 0
    %v56 = vsel %vm51, %v42, 0
    %v59 = vsel %vm51, %v43, 0
    %61 = vmatprep.subr.mxu0 0.0
    %62 = vmatpush1.xpose.msra.mxu0 %v56
    %63 = vmatprep.subr.mxu0 0.0
    %64 = vmatpush1.xpose.msra.mxu0 %v59
    %65 = vmatprep.subr.mxu0 0.0
    %66 = vmatpush1.xpose.msra.mxu0 0.0
    %67 = vmatprep.subr.mxu0 0.0
    %68 = vmatpush1.xpose.msra.mxu0 0.0
    %69 = vmatprep.subr.mxu0 0.0
    %70 = vmatpush1.xpose.msra.mxu0 0.0
    %71 = vmatprep.subr.mxu0 0.0
    %72 = vmatpush1.xpose.msra.mxu0 0.0
    %73 = vmatprep.subr.mxu0 0.0
    %74 = vmatpush1.xpose.msra.mxu0 0.0
    %75 = vmatprep.subr.mxu0 0.0
    %76 = vmatpush1.xpose.msra.mxu0 0.0
    %77 = vmatprep.subr.mxu0 0.0
    %78 = vmatpush1.xpose.msra.mxu0 0.0
    %79 = vmatprep.subr.mxu0 0.0
    %80 = vmatpush1.xpose.msra.mxu0 0.0
    %81 = vmatprep.subr.mxu0 0.0
    %82 = vmatpush1.xpose.msra.mxu0 0.0
    %83 = vmatprep.subr.mxu0 0.0
    %84 = vmatpush1.xpose.msra.mxu0 0.0
    %85 = vmatprep.subr.mxu0 0.0
    %86 = vmatpush1.xpose.msra.mxu0 0.0
    %87 = vmatprep.subr.mxu0 0.0
    %88 = vmatpush1.xpose.msra.mxu0 0.0
    %89 = vmatprep.subr.mxu0 0.0
    %90 = vmatpush1.xpose.msra.mxu0 0.0
    %91 = vmatprep.subr.mxu0 0.0
    %92 = vmatpush1.xpose.msra.mxu0 0.0
    %93 = vmatprep.subr.mxu0 0.0
    %94 = vmatpush1.xpose.msra.mxu0 0.0
    %95 = vmatprep.subr.mxu0 0.0
    %96 = vmatpush1.xpose.msra.mxu0 0.0
    %97 = vmatprep.subr.mxu0 0.0
    %98 = vmatpush1.xpose.msra.mxu0 0.0
    %99 = vmatprep.subr.mxu0 0.0
    %100 = vmatpush1.xpose.msra.mxu0 0.0
    %101 = vmatprep.subr.mxu0 0.0
    %102 = vmatpush1.xpose.msra.mxu0 0.0
    %103 = vmatprep.subr.mxu0 0.0
    %104 = vmatpush1.xpose.msra.mxu0 0.0
    %105 = vmatprep.subr.mxu0 0.0
    %106 = vmatpush1.xpose.msra.mxu0 0.0
    %107 = vmatprep.subr.mxu0 0.0
    %108 = vmatpush1.xpose.msra.mxu0 0.0
    %109 = vmatprep.subr.mxu0 0.0
    %110 = vmatpush1.xpose.msra.mxu0 0.0
    %111 = vmatprep.subr.mxu0 0.0
    %112 = vmatpush1.xpose.msra.mxu0 0.0
    %113 = vmatprep.subr.mxu0 0.0
    %114 = vmatpush1.xpose.msra.mxu0 0.0
    %115 = vmatprep.subr.mxu0 0.0
    %116 = vmatpush1.xpose.msra.mxu0 0.0
    %117 = vmatprep.subr.mxu0 0.0
    %118 = vmatpush1.xpose.msra.mxu0 0.0
    %119 = vmatprep.subr.mxu0 0.0
    %120 = vmatpush1.xpose.msra.mxu0 0.0
    %121 = vmatprep.subr.mxu0 0.0
    %122 = vmatpush1.xpose.msra.mxu0 0.0
    %123 = vmatprep.subr.mxu0 0.0
    %124 = vmatpush1.xpose.msra.mxu0 0.0
    %125 = vmatprep.mubr.f32.mxu0 0.0
    %126 = vmatmul.mubr.f32.gmra.mrb[0].mxu0 %v53
    %v127 = vpop.f32.mrb[0].mxu0
    %v128 = vadd.f32 %v49, %v127
    %v129 = vpop.f32.mrb[0].mxu0
    %130 = vdwg.mxu0
    %131 = vst.msk [vmem:[#allocation7] sm:$0xff] %vm51, %v128
    // Predicated region
    $region22: #{platt_forward.1} parent=1 // pred_check
      _
    $region23: #{platt_forward.1} parent=1 // pred_check_branch
      %133 = sbr.rel (0) target = $region25
    $region24: #{platt_forward.1} parent=1 // pred_region
      %s135 = ssub.s32 128, 128
      %136 = vsyncadd [#allocation4], %s135
      %s138 = sshll.u32 [#allocation7], 4
      %s139 = int_to_ptr.vmem [resolvable:$true] %s138
      %141 = dma.vmem_to_hbm [thread:$0]  %s139, 128, %s3, [#allocation4]
    $region25: #{platt_forward.1} parent=1 // pred_fallthru
      _
    // Predicated region
    $region26: #{platt_forward.1} parent=1 // pred_check
      _
    $region27: #{platt_forward.1} parent=1 // pred_check_branch
      %143 = sbr.rel (0) target = $region29
    $region28: #{platt_forward.1} parent=1 // pred_region
      %144 = dma.done [#allocation4], 128
    $region29: #{platt_forward.1} parent=1 // pred_fallthru
      _
    %145 = vsyncpa [#allocation3], 1
    %146 = vsyncpa [#allocation6], 1
    %147 = vsyncpa [#allocation4], 1

</llo_original>
